<compile_context>
chip_gen: v7x
topology: tpu7x:2x2x1
jax: 0.10.0
libtpu: 0.0.40
codegen_flags: <defaults>
</compile_context>

<pallas_src>
import jax
import jax.numpy as jnp
from jax.experimental import pallas as pl
from jax.experimental.pallas import tpu as pltpu


def mlp_kernel(x_ref, w1_ref, b1_ref, w2_ref, b2_ref, w3_ref, b3_ref, o_ref):
    # x_ref: (8, TN) -- features on sublanes, batch on lanes.
    x = x_ref[...]
    # Layer 1: (6,8) @ (8,TN) + (6,1) -> ReLU
    h = jnp.dot(w1_ref[...], x, preferred_element_type=jnp.float32)
    h = jnp.maximum(h + b1_ref[...], 0.0)
    # Layer 2: (4,6) @ (6,TN) + (4,1) -> ReLU
    h = jnp.dot(w2_ref[...], h, preferred_element_type=jnp.float32)
    h = jnp.maximum(h + b2_ref[...], 0.0)
    # Layer 3: (1,4) @ (4,TN) + (1,1) -> ReLU (torch model applies ReLU here too)
    h = jnp.dot(w3_ref[...], h, preferred_element_type=jnp.float32)
    h = jnp.maximum(h + b3_ref[...], 0.0)
    o_ref[...] = h.astype(o_ref.dtype)  # lane-dense (1, TN) store


def mlp_forward(x, w1, b1, w2, b2, w3, b3, *, tile_n=256):
    """x: (N, 8) float32.  Weights torch-native (out, in); biases (out, 1)."""
    n = x.shape[0]
    n_tiles = pl.cdiv(n, tile_n)
    n_pad = n_tiles * tile_n
    # Transpose so batch maps to lanes; zero-pad batch to a tile multiple.
    xt = jnp.pad(x.T.astype(jnp.float32), ((0, 0), (0, n_pad - n)))

    const = lambda shape: pl.BlockSpec(shape, lambda i: (0, 0))

    out_t = pl.pallas_call(
        mlp_kernel,
        out_shape=jax.ShapeDtypeStruct((1, n_pad), jnp.float32),
        grid=(n_tiles,),
        in_specs=[
            pl.BlockSpec((8, tile_n), lambda i: (0, i)),  # batch-tiled input
            const(w1.shape), const(b1.shape),             # weights resident
            const(w2.shape), const(b2.shape),
            const(w3.shape), const(b3.shape),
        ],
        out_specs=pl.BlockSpec((1, tile_n), lambda i: (0, i)),
        compiler_params=pltpu.CompilerParams(
            dimension_semantics=("parallel",)),
    )(xt, w1, b1, w2, b2, w3, b3)

    # Drop batch padding, return (N, 1) like the PyTorch module.
    return out_t[0, :n].reshape(n, 1)


def init_params(key):
    # Mimic torch.nn.Linear default init: U(-1/sqrt(fan_in), 1/sqrt(fan_in)).
    # Weights stored torch-native (out_features, in_features), biases (out, 1).
    ks = jax.random.split(key, 6)

    def layer(kw, kb, fan_in, fan_out):
        bound = 1.0 / jnp.sqrt(jnp.float32(fan_in))
        w = jax.random.uniform(kw, (fan_out, fan_in), jnp.float32, -bound, bound)
        b = jax.random.uniform(kb, (fan_out, 1), jnp.float32, -bound, bound)
        return w, b

    w1, b1 = layer(ks[0], ks[1], 8, 6)
    w2, b2 = layer(ks[2], ks[3], 6, 4)
    w3, b3 = layer(ks[4], ks[5], 4, 1)
    return w1, b1, w2, b2, w3, b3


if __name__ == "__main__":
    key = jax.random.PRNGKey(0)
    kx, kp = jax.random.split(key)
    n = 1000  # not a multiple of the tile: exercises padding + multi-step grid
    x = jax.random.normal(kx, (n, 8), dtype=jnp.float32)
    w1, b1, w2, b2, w3, b3 = init_params(kp)

    out = jax.block_until_ready(mlp_forward(x, w1, b1, w2, b2, w3, b3))

    # Pure-JAX reference (weights are (out, in), biases (out, 1)).
    relu = lambda v: jnp.maximum(v, 0.0)
    ref = relu(relu(relu(x @ w1.T + b1.T) @ w2.T + b2.T) @ w3.T + b3.T)
    assert out.shape == (n, 1)
    assert jnp.allclose(out, ref, atol=1e-5, rtol=1e-5), "mismatch vs reference"

    print("KERNEL_OK")
</pallas_src>

<mosaic_0001>
module attributes {stable_mosaic.version = 11 : i64} {
  func.func @mlp_kernel(%arg0: i32, %arg1: memref<8x256xf32, #tpu.memory_space<vmem>>, %arg2: memref<6x8xf32, #tpu.memory_space<vmem>>, %arg3: memref<6x1xf32, #tpu.memory_space<vmem>>, %arg4: memref<4x6xf32, #tpu.memory_space<vmem>>, %arg5: memref<4x1xf32, #tpu.memory_space<vmem>>, %arg6: memref<1x4xf32, #tpu.memory_space<vmem>>, %arg7: memref<1x1xf32, #tpu.memory_space<vmem>>, %arg8: memref<1x256xf32, #tpu.memory_space<vmem>>) attributes {dimension_semantics = [#tpu.dimension_semantics<parallel>], iteration_bounds = array<i64: 4>, scalar_prefetch = 0 : i64, scratch_operands = 0 : i64, tpu.core_type = #tpu.core_type<tc>, window_params = [{transform_indices = @transform_0, window_bounds = array<i64: 8, 256>}, {pipeline_mode = #tpu.pipeline_mode<synchronous>, transform_indices = @transform_1, window_bounds = array<i64: 6, 8>}, {pipeline_mode = #tpu.pipeline_mode<synchronous>, transform_indices = @transform_2, window_bounds = array<i64: 6, 1>}, {pipeline_mode = #tpu.pipeline_mode<synchronous>, transform_indices = @transform_3, window_bounds = array<i64: 4, 6>}, {pipeline_mode = #tpu.pipeline_mode<synchronous>, transform_indices = @transform_4, window_bounds = array<i64: 4, 1>}, {pipeline_mode = #tpu.pipeline_mode<synchronous>, transform_indices = @transform_5, window_bounds = array<i64: 1, 4>}, {pipeline_mode = #tpu.pipeline_mode<synchronous>, transform_indices = @transform_6, window_bounds = array<i64: 1, 1>}, {transform_indices = @transform_7, window_bounds = array<i64: 1, 256>}]} {
    %c0 = arith.constant 0 : index
    %c0_0 = arith.constant 0 : index
    %0 = vector.load %arg1[%c0, %c0_0] : memref<8x256xf32, #tpu.memory_space<vmem>>, vector<8x256xf32>
    %c0_1 = arith.constant 0 : index
    %c0_2 = arith.constant 0 : index
    %1 = vector.load %arg2[%c0_1, %c0_2] : memref<6x8xf32, #tpu.memory_space<vmem>>, vector<6x8xf32>
    %cst = arith.constant dense<0.000000e+00> : vector<6x256xf32>
    %2 = tpu.matmul %1, %0, %cst {dimension_numbers = #tpu.dot_dimension_numbers<[1], [0], [0], [1], [0, 0, 1, 1], [], []>} : vector<6x8xf32>, vector<8x256xf32>, vector<6x256xf32> -> vector<6x256xf32>
    %c0_3 = arith.constant 0 : index
    %c0_4 = arith.constant 0 : index
    %3 = vector.load %arg3[%c0_3, %c0_4] : memref<6x1xf32, #tpu.memory_space<vmem>>, vector<6x1xf32>
    %4 = vector.broadcast %3 : vector<6x1xf32> to vector<6x256xf32>
    %5 = arith.addf %2, %4 : vector<6x256xf32>
    %cst_5 = arith.constant 0.000000e+00 : f32
    %6 = vector.broadcast %cst_5 : f32 to vector<6x256xf32>
    %7 = arith.maximumf %5, %6 : vector<6x256xf32>
    %c0_6 = arith.constant 0 : index
    %c0_7 = arith.constant 0 : index
    %8 = vector.load %arg4[%c0_6, %c0_7] : memref<4x6xf32, #tpu.memory_space<vmem>>, vector<4x6xf32>
    %cst_8 = arith.constant dense<0.000000e+00> : vector<4x256xf32>
    %9 = tpu.matmul %8, %7, %cst_8 {dimension_numbers = #tpu.dot_dimension_numbers<[1], [0], [0], [1], [0, 0, 1, 1], [], []>} : vector<4x6xf32>, vector<6x256xf32>, vector<4x256xf32> -> vector<4x256xf32>
    %c0_9 = arith.constant 0 : index
    %c0_10 = arith.constant 0 : index
    %10 = vector.load %arg5[%c0_9, %c0_10] : memref<4x1xf32, #tpu.memory_space<vmem>>, vector<4x1xf32>
    %11 = vector.broadcast %10 : vector<4x1xf32> to vector<4x256xf32>
    %12 = arith.addf %9, %11 : vector<4x256xf32>
    %cst_11 = arith.constant 0.000000e+00 : f32
    %13 = vector.broadcast %cst_11 : f32 to vector<4x256xf32>
    %14 = arith.maximumf %12, %13 : vector<4x256xf32>
    %c0_12 = arith.constant 0 : index
    %c0_13 = arith.constant 0 : index
    %15 = vector.load %arg6[%c0_12, %c0_13] : memref<1x4xf32, #tpu.memory_space<vmem>>, vector<1x4xf32>
    %cst_14 = arith.constant dense<0.000000e+00> : vector<1x256xf32>
    %16 = tpu.matmul %15, %14, %cst_14 {dimension_numbers = #tpu.dot_dimension_numbers<[1], [0], [0], [1], [0, 0, 1, 1], [], []>} : vector<1x4xf32>, vector<4x256xf32>, vector<1x256xf32> -> vector<1x256xf32>
    %c0_15 = arith.constant 0 : index
    %c0_16 = arith.constant 0 : index
    %17 = vector.load %arg7[%c0_15, %c0_16] : memref<1x1xf32, #tpu.memory_space<vmem>>, vector<1x1xf32>
    %18 = vector.broadcast %17 : vector<1x1xf32> to vector<1x256xf32>
    %19 = arith.addf %16, %18 : vector<1x256xf32>
    %cst_17 = arith.constant 0.000000e+00 : f32
    %20 = vector.broadcast %cst_17 : f32 to vector<1x256xf32>
    %21 = arith.maximumf %19, %20 : vector<1x256xf32>
    %c0_18 = arith.constant 0 : index
    %c0_19 = arith.constant 0 : index
    %22 = vector.load %arg8[%c0_18, %c0_19] : memref<1x256xf32, #tpu.memory_space<vmem>>, vector<1x256xf32>
    tpu.vector_store %arg8[%c0_18, %c0_19], %21 {strides = array<i32>} : memref<1x256xf32, #tpu.memory_space<vmem>>, vector<1x256xf32>,
    return
  }
  func.func @transform_0(%arg0: i32) -> (i32, i32) {
    %c0_i32 = arith.constant 0 : i32
    %c0_i32_0 = arith.constant 0 : i32
    return %c0_i32, %arg0 : i32, i32
  }
  func.func @transform_1(%arg0: i32) -> (i32, i32) {
    %c0_i32 = arith.constant 0 : i32
    %c0_i32_0 = arith.constant 0 : i32
    %c0_i32_1 = arith.constant 0 : i32
    return %c0_i32, %c0_i32_0 : i32, i32
  }
  func.func @transform_2(%arg0: i32) -> (i32, i32) {
    %c0_i32 = arith.constant 0 : i32
    %c0_i32_0 = arith.constant 0 : i32
    %c0_i32_1 = arith.constant 0 : i32
    return %c0_i32, %c0_i32_0 : i32, i32
  }
  func.func @transform_3(%arg0: i32) -> (i32, i32) {
    %c0_i32 = arith.constant 0 : i32
    %c0_i32_0 = arith.constant 0 : i32
    %c0_i32_1 = arith.constant 0 : i32
    return %c0_i32, %c0_i32_0 : i32, i32
  }
  func.func @transform_4(%arg0: i32) -> (i32, i32) {
    %c0_i32 = arith.constant 0 : i32
    %c0_i32_0 = arith.constant 0 : i32
    %c0_i32_1 = arith.constant 0 : i32
    return %c0_i32, %c0_i32_0 : i32, i32
  }
  func.func @transform_5(%arg0: i32) -> (i32, i32) {
    %c0_i32 = arith.constant 0 : i32
    %c0_i32_0 = arith.constant 0 : i32
    %c0_i32_1 = arith.constant 0 : i32
    return %c0_i32, %c0_i32_0 : i32, i32
  }
  func.func @transform_6(%arg0: i32) -> (i32, i32) {
    %c0_i32 = arith.constant 0 : i32
    %c0_i32_0 = arith.constant 0 : i32
    %c0_i32_1 = arith.constant 0 : i32
    return %c0_i32, %c0_i32_0 : i32, i32
  }
  func.func @transform_7(%arg0: i32) -> (i32, i32) {
    %c0_i32 = arith.constant 0 : i32
    %c0_i32_0 = arith.constant 0 : i32
    return %c0_i32, %arg0 : i32, i32
  }
}

</mosaic_0001>

<llo_original>
// kernel: tpu_custom_call.1
$region0: #{tpu_custom_call.1}
  #allocation0 [shape = 'u32[]', space=smem, size = 0x4, offset = 0x4, fixed_abs, tag = 'smem constant byte address 0x4 - core index']
  #allocation1 [shape = 'u32[144,128]{1,0:T(1,128)}', space=vmem, size = 0x12000, scoped, tag = 'internal scratch']
  #allocation2 [shape = 'f32[1,1]{1,0:T(1,128)S(1)}', space=vmem, size = 0x200, scoped, tag = 'scoped memory for tpu_custom_call.1']
  %s0 = inlined_call_operand.hbm [shape: f32[8,1024], index: 0, kind: input, shape index: {}]
  %s1 = inlined_call_operand.vmem [shape: f32[6,8], index: 1, kind: input, shape index: {}]
  %s2 = inlined_call_operand.vmem [shape: f32[6,1], index: 2, kind: input, shape index: {}]
  %s3 = inlined_call_operand.vmem [shape: f32[4,6], index: 3, kind: input, shape index: {}]
  %s4 = inlined_call_operand.vmem [shape: f32[4,1], index: 4, kind: input, shape index: {}]
  %s5 = inlined_call_operand.vmem [shape: f32[1,4], index: 5, kind: input, shape index: {}]
  %s6 = inlined_call_operand.<no memory space> [shape: f32[1,1], index: 6, kind: input, shape index: {}]
  %s7 = inlined_call_operand.hbm [shape: f32[1,1024], index: 7, kind: output, shape index: {}]
  %s8 = sld [smem:[#allocation0]]
  $region65: #{tpu_custom_call.1} parent=0
    _
  %s10 = ssub.s32 1, %s8
  %s11 = scalar_select 0, %s10, %s8
  %v12 = vstv %s6
  %13 = vst [vmem:[#allocation2] sm:$0x1] %v12
  $region1: #{tpu_custom_call.1} parent=0
    #allocation3 [shape = 'u8[16384]{0}', space=vmem, size = 0x4000, scoped, tag = 'input window, operand 0']
    #allocation4 [shape = 's32[2]{0}', space=sflag, size = 0x8, scoped, tag = 'scoped memory for tpu_custom_call.1']
    #allocation5 [shape = 's32[2]{0}', space=sflag, size = 0x8, scoped, tag = 'scoped memory for tpu_custom_call.1']
    #allocation6 [shape = 'u8[2048]{0}', space=vmem, size = 0x800, scoped, tag = 'output window, operand 0']
    %14 = vsyncpa [#allocation4], 0
    %s15 = scalar_lea.sflag [#allocation4], 1
    %16 = vsyncpa %s15, 0
    %17 = vsyncpa [#allocation5], 0
    %s18 = scalar_lea.sflag [#allocation5], 1
    %19 = vsyncpa %s18, 0
    loop: start=0, step=1, limit=6
    $region2: #{tpu_custom_call.1} parent=1 // loop_pre_header
      _
    $region3: #{tpu_custom_call.1} parent=1 // loop_header
      %s21 = sphi 0, %s25
      %p22 = scmp.ge.s32.totalorder %s21, 6
      %s31 = sphi 0, %s33
      %s34 = sphi 0, %s31
      %s35 = sphi 0, %s34
      %s51 = sphi 0, %s35
      %s55 = sphi 0, %s55
      %s57 = sphi 0, %s55
      %s58 = sphi 0, %s57
      %s72 = sphi 0, %s58
      %s76 = sphi 0, %s76
      %s78 = sphi 0, %s76
      %s79 = sphi 0, %s78
      %s93 = sphi 0, %s79
      %s97 = sphi 0, %s97
      %s99 = sphi 0, %s97
      %s100 = sphi 0, %s99
      %s114 = sphi 0, %s100
      %s118 = sphi 0, %s118
      %s120 = sphi 0, %s118
      %s121 = sphi 0, %s120
      %s135 = sphi 0, %s121
      %s139 = sphi 0, %s139
      %s141 = sphi 0, %s139
      %s142 = sphi 0, %s141
      %s156 = sphi 0, %s142
      %s160 = sphi 0, %s160
      %s162 = sphi 0, %s160
      %s163 = sphi 0, %s162
      %s177 = sphi 0, %s163
      %s183 = sphi 0, %s185
      %s186 = sphi 0, %s183
      %s187 = sphi 0, %s186
      %s203 = sphi 0, %s187
    $region4: #{tpu_custom_call.1} parent=1 // loop_header_branch
      %24 = sbr.rel (%p22) target = $region8
    $region5: #{tpu_custom_call.1} parent=1 // loop_body
      %s26 = ssub.s32 %s21, 1
      %s27 = ssub.s32 %s21, 2
      %s28 = sadd.s32 %s21, 1
      %s29 = ssub.s32 %s21, %s28
      %p30 = scmp.eq.s32.totalorder %s29, 0
      %s32 = sadd.s32 %s31, 1
      %s33 = scalar_select %p30, %s31, %s32
      %p36 = pneg %p30
      %p37 = scmp.eq.s32.totalorder %s21, 3
      %p38 = por %p36, %p37
      %p39 = scmp.ne.s32.totalorder %s31, %s34
      %p40 = scmp.eq.s32.totalorder %s21, 0
      %p41 = por %p39, %p40
      %p42 = scmp.ne.s32.totalorder %s31, %s34
      %p43 = scmp.eq.s32.totalorder %s26, 3
      %p44 = por %p42, %p43
      %p45 = scmp.ne.s32.totalorder %s34, %s35
      %p46 = scmp.eq.s32.totalorder %s26, 0
      %p47 = por %p45, %p46
      %p48 = scmp.ne.s32.totalorder %s34, %s35
      %p49 = scmp.eq.s32.totalorder %s27, 3
      %p50 = por %p48, %p49
      %p52 = scmp.ne.s32.totalorder %s35, %s51
      %p53 = scmp.eq.s32.totalorder %s27, 0
      %p54 = por %p52, %p53
      %s56 = sadd.s32 %s55, 1
      %p59 = scmp.eq.s32.totalorder %s21, 3
      %p60 = scmp.ne.s32.totalorder %s55, %s57
      %p61 = scmp.eq.s32.totalorder %s21, 0
      %p62 = por %p60, %p61
      %p63 = scmp.ne.s32.totalorder %s55, %s57
      %p64 = scmp.eq.s32.totalorder %s26, 3
      %p65 = por %p63, %p64
      %p66 = scmp.ne.s32.totalorder %s57, %s58
      %p67 = scmp.eq.s32.totalorder %s26, 0
      %p68 = por %p66, %p67
      %p69 = scmp.ne.s32.totalorder %s57, %s58
      %p70 = scmp.eq.s32.totalorder %s27, 3
      %p71 = por %p69, %p70
      %p73 = scmp.ne.s32.totalorder %s58, %s72
      %p74 = scmp.eq.s32.totalorder %s27, 0
      %p75 = por %p73, %p74
      %s77 = sadd.s32 %s76, 1
      %p80 = scmp.eq.s32.totalorder %s21, 3
      %p81 = scmp.ne.s32.totalorder %s76, %s78
      %p82 = scmp.eq.s32.totalorder %s21, 0
      %p83 = por %p81, %p82
      %p84 = scmp.ne.s32.totalorder %s76, %s78
      %p85 = scmp.eq.s32.totalorder %s26, 3
      %p86 = por %p84, %p85
      %p87 = scmp.ne.s32.totalorder %s78, %s79
      %p88 = scmp.eq.s32.totalorder %s26, 0
      %p89 = por %p87, %p88
      %p90 = scmp.ne.s32.totalorder %s78, %s79
      %p91 = scmp.eq.s32.totalorder %s27, 3
      %p92 = por %p90, %p91
      %p94 = scmp.ne.s32.totalorder %s79, %s93
      %p95 = scmp.eq.s32.totalorder %s27, 0
      %p96 = por %p94, %p95
      %s98 = sadd.s32 %s97, 1
      %p101 = scmp.eq.s32.totalorder %s21, 3
      %p102 = scmp.ne.s32.totalorder %s97, %s99
      %p103 = scmp.eq.s32.totalorder %s21, 0
      %p104 = por %p102, %p103
      %p105 = scmp.ne.s32.totalorder %s97, %s99
      %p106 = scmp.eq.s32.totalorder %s26, 3
      %p107 = por %p105, %p106
      %p108 = scmp.ne.s32.totalorder %s99, %s100
      %p109 = scmp.eq.s32.totalorder %s26, 0
      %p110 = por %p108, %p109
      %p111 = scmp.ne.s32.totalorder %s99, %s100
      %p112 = scmp.eq.s32.totalorder %s27, 3
      %p113 = por %p111, %p112
      %p115 = scmp.ne.s32.totalorder %s100, %s114
      %p116 = scmp.eq.s32.totalorder %s27, 0
      %p117 = por %p115, %p116
      %s119 = sadd.s32 %s118, 1
      %p122 = scmp.eq.s32.totalorder %s21, 3
      %p123 = scmp.ne.s32.totalorder %s118, %s120
      %p124 = scmp.eq.s32.totalorder %s21, 0
      %p125 = por %p123, %p124
      %p126 = scmp.ne.s32.totalorder %s118, %s120
      %p127 = scmp.eq.s32.totalorder %s26, 3
      %p128 = por %p126, %p127
      %p129 = scmp.ne.s32.totalorder %s120, %s121
      %p130 = scmp.eq.s32.totalorder %s26, 0
      %p131 = por %p129, %p130
      %p132 = scmp.ne.s32.totalorder %s120, %s121
      %p133 = scmp.eq.s32.totalorder %s27, 3
      %p134 = por %p132, %p133
      %p136 = scmp.ne.s32.totalorder %s121, %s135
      %p137 = scmp.eq.s32.totalorder %s27, 0
      %p138 = por %p136, %p137
      %s140 = sadd.s32 %s139, 1
      %p143 = scmp.eq.s32.totalorder %s21, 3
      %p144 = scmp.ne.s32.totalorder %s139, %s141
      %p145 = scmp.eq.s32.totalorder %s21, 0
      %p146 = por %p144, %p145
      %p147 = scmp.ne.s32.totalorder %s139, %s141
      %p148 = scmp.eq.s32.totalorder %s26, 3
      %p149 = por %p147, %p148
      %p150 = scmp.ne.s32.totalorder %s141, %s142
      %p151 = scmp.eq.s32.totalorder %s26, 0
      %p152 = por %p150, %p151
      %p153 = scmp.ne.s32.totalorder %s141, %s142
      %p154 = scmp.eq.s32.totalorder %s27, 3
      %p155 = por %p153, %p154
      %p157 = scmp.ne.s32.totalorder %s142, %s156
      %p158 = scmp.eq.s32.totalorder %s27, 0
      %p159 = por %p157, %p158
      %s161 = sadd.s32 %s160, 1
      %p164 = scmp.eq.s32.totalorder %s21, 3
      %p165 = scmp.ne.s32.totalorder %s160, %s162
      %p166 = scmp.eq.s32.totalorder %s21, 0
      %p167 = por %p165, %p166
      %p168 = scmp.ne.s32.totalorder %s160, %s162
      %p169 = scmp.eq.s32.totalorder %s26, 3
      %p170 = por %p168, %p169
      %p171 = scmp.ne.s32.totalorder %s162, %s163
      %p172 = scmp.eq.s32.totalorder %s26, 0
      %p173 = por %p171, %p172
      %p174 = scmp.ne.s32.totalorder %s162, %s163
      %p175 = scmp.eq.s32.totalorder %s27, 3
      %p176 = por %p174, %p175
      %p178 = scmp.ne.s32.totalorder %s163, %s177
      %p179 = scmp.eq.s32.totalorder %s27, 0
      %p180 = por %p178, %p179
      %s181 = ssub.s32 %s21, %s28
      %p182 = scmp.eq.s32.totalorder %s181, 0
      %s184 = sadd.s32 %s183, 1
      %s185 = scalar_select %p182, %s183, %s184
      %p188 = pneg %p182
      %p189 = scmp.eq.s32.totalorder %s21, 3
      %p190 = por %p188, %p189
      %p191 = scmp.ne.s32.totalorder %s183, %s186
      %p192 = scmp.eq.s32.totalorder %s21, 0
      %p193 = por %p191, %p192
      %p194 = scmp.ne.s32.totalorder %s183, %s186
      %p195 = scmp.eq.s32.totalorder %s26, 3
      %p196 = por %p194, %p195
      %p197 = scmp.ne.s32.totalorder %s186, %s187
      %p198 = scmp.eq.s32.totalorder %s26, 0
      %p199 = por %p197, %p198
      %p200 = scmp.ne.s32.totalorder %s186, %s187
      %p201 = scmp.eq.s32.totalorder %s27, 3
      %p202 = por %p200, %p201
      %p204 = scmp.ne.s32.totalorder %s187, %s203
      %p205 = scmp.eq.s32.totalorder %s27, 0
      %p206 = por %p204, %p205
      %p207 = scmp.le.s32.totalorder 1, %s21
      %p208 = scmp.lt.s32.totalorder %s21, 5
      %p209 = pnand %p207, %p208
      %p210 = pneg %p209
      // Predicated region
      $region9: #{tpu_custom_call.1} parent=5 // pred_check
        _
      $region10: #{tpu_custom_call.1} parent=5 // pred_check_branch
        %212 = sbr.rel (%p209) target = $region12
      $region11: #{tpu_custom_call.1} parent=5 // pred_region
        %s213 = ssub.s32 %s21, 1
        // Predicated region
        $region13: #{tpu_custom_call.1} parent=11 // pred_check
          %p214 = pneg %p68
        $region14: #{tpu_custom_call.1} parent=11 // pred_check_branch
          %216 = sbr.rel (%p214) target = $region16
        $region15: #{tpu_custom_call.1} parent=11 // pred_region
          _
        $region16: #{tpu_custom_call.1} parent=11 // pred_fallthru
          _
        // Predicated region
        $region17: #{tpu_custom_call.1} parent=11 // pred_check
          %p217 = pneg %p89
        $region18: #{tpu_custom_call.1} parent=11 // pred_check_branch
          %219 = sbr.rel (%p217) target = $region20
        $region19: #{tpu_custom_call.1} parent=11 // pred_region
          _
        $region20: #{tpu_custom_call.1} parent=11 // pred_fallthru
          _
        // Predicated region
        $region21: #{tpu_custom_call.1} parent=11 // pred_check
          %p220 = pneg %p110
        $region22: #{tpu_custom_call.1} parent=11 // pred_check_branch
          %222 = sbr.rel (%p220) target = $region24
        $region23: #{tpu_custom_call.1} parent=11 // pred_region
          _
        $region24: #{tpu_custom_call.1} parent=11 // pred_fallthru
          _
        // Predicated region
        $region25: #{tpu_custom_call.1} parent=11 // pred_check
          %p223 = pneg %p131
        $region26: #{tpu_custom_call.1} parent=11 // pred_check_branch
          %225 = sbr.rel (%p223) target = $region28
        $region27: #{tpu_custom_call.1} parent=11 // pred_region
          _
        $region28: #{tpu_custom_call.1} parent=11 // pred_fallthru
          _
        // Predicated region
        $region29: #{tpu_custom_call.1} parent=11 // pred_check
          %p226 = pneg %p152
        $region30: #{tpu_custom_call.1} parent=11 // pred_check_branch
          %228 = sbr.rel (%p226) target = $region32
        $region31: #{tpu_custom_call.1} parent=11 // pred_region
          _
        $region32: #{tpu_custom_call.1} parent=11 // pred_fallthru
          _
        // Predicated region
        $region33: #{tpu_custom_call.1} parent=11 // pred_check
          %p229 = pneg %p173
        $region34: #{tpu_custom_call.1} parent=11 // pred_check_branch
          %231 = sbr.rel (%p229) target = $region36
        $region35: #{tpu_custom_call.1} parent=11 // pred_region
          _
        $region36: #{tpu_custom_call.1} parent=11 // pred_fallthru
          _
      $region12: #{tpu_custom_call.1} parent=5 // pred_fallthru
        _
      %p232 = scmp.lt.s32.totalorder %s21, 4
      // Predicated region
      $region37: #{tpu_custom_call.1} parent=5 // pred_check
        %p233 = pneg %p232
      $region38: #{tpu_custom_call.1} parent=5 // pred_check_branch
        %235 = sbr.rel (%p233) target = $region40
      $region39: #{tpu_custom_call.1} parent=5 // pred_region
        // Predicated region
        $region41: #{tpu_custom_call.1} parent=39 // pred_check
          %p236 = pneg %p41
        $region42: #{tpu_custom_call.1} parent=39 // pred_check_branch
          %238 = sbr.rel (%p236) target = $region44
        $region43: #{tpu_custom_call.1} parent=39 // pred_region
          %s239 = sand.u32 %s31, 1
          %s240 = scalar_lea.sflag [#allocation4], %s239
          %s241 = sand.u32 %s31, 1
          %s242 = smul.addr %s241, 16
          %s243 = scalar_lea.vmem [#allocation3], %s242
          %s244 = smul.u32 2, %s21
          %s246 = ssub.s32 256, 256
          %247 = vsyncadd %s240, %s246
          %s248 = smul.addr %s244, 128
          %s249 = scalar_lea.hbm %s0, %s248
          %s251 = sshll.u32 %s243, 4
          %s252 = int_to_ptr.vmem [resolvable:$true] %s251
          %254 = dma.hbm_to_vmem [thread:$0]  %s249, 256, %s252, %s240
        $region44: #{tpu_custom_call.1} parent=39 // pred_fallthru
          _
      $region40: #{tpu_custom_call.1} parent=5 // pred_fallthru
        _
      %p255 = scmp.le.s32.totalorder 1, %s21
      %p256 = scmp.lt.s32.totalorder %s21, 5
      %p257 = pnand %p255, %p256
      %p258 = pneg %p257
      // Predicated region
      $region45: #{tpu_custom_call.1} parent=5 // pred_check
        _
      $region46: #{tpu_custom_call.1} parent=5 // pred_check_branch
        %260 = sbr.rel (%p257) target = $region48
      $region47: #{tpu_custom_call.1} parent=5 // pred_region
        %s261 = ssub.s32 %s21, 1
        %s262 = sand.u32 %s34, 1
        %s263 = scalar_lea.sflag [#allocation4], %s262
        %s264 = sand.u32 %s34, 1
        %s265 = smul.addr %s264, 16
        %s266 = scalar_lea.vmem [#allocation3], %s265
        // Predicated region
        $region49: #{tpu_custom_call.1} parent=47 // pred_check
          %p267 = pneg %p47
        $region50: #{tpu_custom_call.1} parent=47 // pred_check_branch
          %269 = sbr.rel (%p267) target = $region52
        $region51: #{tpu_custom_call.1} parent=47 // pred_region
          %270 = dma.done %s263, 256
        $region52: #{tpu_custom_call.1} parent=47 // pred_fallthru
          _
        %s271 = sand.u32 %s34, 1
        %s272 = scalar_lea.sflag [#allocation4], %s271
        %s273 = sand.u32 %s34, 1
        %s274 = smul.addr %s273, 16
        %s275 = scalar_lea.vmem [#allocation3], %s274
        %p276 = pneg %p47
        %p277 = pneg %p44
        %p278 = pneg %p68
        %p279 = pneg %p65
        %p280 = pneg %p89
        %p281 = pneg %p86
        %p282 = pneg %p110
        %p283 = pneg %p107
        %p284 = pneg %p131
        %p285 = pneg %p128
        %p286 = pneg %p152
        %p287 = pneg %p149
        %p288 = pneg %p173
        %p289 = pneg %p170
        %p290 = pneg %p199
        %p291 = pneg %p196
        %s292 = sand.u32 %s186, 1
        %s293 = scalar_lea.sflag [#allocation5], %s292
        %s294 = sand.u32 %s186, 1
        %s295 = smul.addr %s294, 2
        %s296 = scalar_lea.vmem [#allocation6], %s295
        %s297 = smul.u32 2, %s26
        %s298 = smul.u32 2, %s26
        %v299 = vld [vmem:[%s266] sm:$0xff]
        %v300 = vld [vmem:[%s266 + $0x8] sm:$0xff]
        %v301 = vld [vmem:[%s1] sm:$0x3f]
        %v302 = vld [vmem:[%s2] sm:$0x3f]
        %304 = vset.pattern.permute.xlu0 0
        %305 = vperm.xlu0 %304, %v302
        %v306 = vpop.permute.xlu0 %305
        %vm308 = vcmask 64512
        %v310 = vsel %vm308, %v301, 0
        %312 = vmatprep.subr.mxu0 %v300
        %313 = vmatpush1.msra.mxu0 %v299
        %314 = vmatprep.subr.mxu0 0.0
        %315 = vmatpush1.msra.mxu0 0.0
        %316 = vmatprep.subr.mxu0 0.0
        %317 = vmatpush1.msra.mxu0 0.0
        %318 = vmatprep.subr.mxu0 0.0
        %319 = vmatpush1.msra.mxu0 0.0
        %320 = vmatprep.subr.mxu0 0.0
        %321 = vmatpush1.msra.mxu0 0.0
        %322 = vmatprep.subr.mxu0 0.0
        %323 = vmatpush1.msra.mxu0 0.0
        %324 = vmatprep.subr.mxu0 0.0
        %325 = vmatpush1.msra.mxu0 0.0
        %326 = vmatprep.subr.mxu0 0.0
        %327 = vmatpush1.msra.mxu0 0.0
        %328 = vmatprep.subr.mxu0 0.0
        %329 = vmatpush1.msra.mxu0 0.0
        %330 = vmatprep.subr.mxu0 0.0
        %331 = vmatpush1.msra.mxu0 0.0
        %332 = vmatprep.subr.mxu0 0.0
        %333 = vmatpush1.msra.mxu0 0.0
        %334 = vmatprep.subr.mxu0 0.0
        %335 = vmatpush1.msra.mxu0 0.0
        %336 = vmatprep.subr.mxu0 0.0
        %337 = vmatpush1.msra.mxu0 0.0
        %338 = vmatprep.subr.mxu0 0.0
        %339 = vmatpush1.msra.mxu0 0.0
        %340 = vmatprep.subr.mxu0 0.0
        %341 = vmatpush1.msra.mxu0 0.0
        %342 = vmatprep.subr.mxu0 0.0
        %343 = vmatpush1.msra.mxu0 0.0
        %344 = vmatprep.subr.mxu0 0.0
        %345 = vmatpush1.msra.mxu0 0.0
        %346 = vmatprep.subr.mxu0 0.0
        %347 = vmatpush1.msra.mxu0 0.0
        %348 = vmatprep.subr.mxu0 0.0
        %349 = vmatpush1.msra.mxu0 0.0
        %350 = vmatprep.subr.mxu0 0.0
        %351 = vmatpush1.msra.mxu0 0.0
        %352 = vmatprep.subr.mxu0 0.0
        %353 = vmatpush1.msra.mxu0 0.0
        %354 = vmatprep.subr.mxu0 0.0
        %355 = vmatpush1.msra.mxu0 0.0
        %356 = vmatprep.subr.mxu0 0.0
        %357 = vmatpush1.msra.mxu0 0.0
        %358 = vmatprep.subr.mxu0 0.0
        %359 = vmatpush1.msra.mxu0 0.0
        %360 = vmatprep.subr.mxu0 0.0
        %361 = vmatpush1.msra.mxu0 0.0
        %362 = vmatprep.subr.mxu0 0.0
        %363 = vmatpush1.msra.mxu0 0.0
        %364 = vmatprep.subr.mxu0 0.0
        %365 = vmatpush1.msra.mxu0 0.0
        %366 = vmatprep.subr.mxu0 0.0
        %367 = vmatpush1.msra.mxu0 0.0
        %368 = vmatprep.subr.mxu0 0.0
        %369 = vmatpush1.msra.mxu0 0.0
        %370 = vmatprep.subr.mxu0 0.0
        %371 = vmatpush1.msra.mxu0 0.0
        %372 = vmatprep.subr.mxu0 0.0
        %373 = vmatpush1.msra.mxu0 0.0
        %374 = vmatprep.subr.mxu0 0.0
        %375 = vmatpush1.msra.mxu0 0.0
        %376 = vmatprep.mubr.f32.mxu0 0.0
        %377 = vmatmul.mubr.f32.gmra.mrb[0].mxu0 %v310
        %v378 = vpop.f32.mrb[0].mxu0
        %v379 = vadd.f32 %v306, %v378
        %v380 = vpop.f32.mrb[0].mxu0
        %v381 = vadd.f32 %v306, %v380
        %382 = vdwg.mxu0
        %v383 = vmax.f32 %v379, 0.0
        %v384 = vmax.f32 %v381, 0.0
        %v385 = vld [vmem:[%s3] sm:$0xf]
        %v386 = vld [vmem:[%s4] sm:$0xf]
        %388 = vset.pattern.permute.xlu0 0
        %389 = vperm.xlu0 %388, %v386
        %v390 = vpop.permute.xlu0 %389
        %vm392 = vcmask 48128
        %v394 = vsel %vm392, %v385, 0
        %vm396 = vcmask 1045504
        %v398 = vsel %vm396, %v383, 0
        %v401 = vsel %vm396, %v384, 0
        %403 = vmatprep.subr.mxu0 %v401
        %404 = vmatpush1.msra.mxu0 %v398
        %405 = vmatprep.subr.mxu0 0.0
        %406 = vmatpush1.msra.mxu0 0.0
        %407 = vmatprep.subr.mxu0 0.0
        %408 = vmatpush1.msra.mxu0 0.0
        %409 = vmatprep.subr.mxu0 0.0
        %410 = vmatpush1.msra.mxu0 0.0
        %411 = vmatprep.subr.mxu0 0.0
        %412 = vmatpush1.msra.mxu0 0.0
        %413 = vmatprep.subr.mxu0 0.0
        %414 = vmatpush1.msra.mxu0 0.0
        %415 = vmatprep.subr.mxu0 0.0
        %416 = vmatpush1.msra.mxu0 0.0
        %417 = vmatprep.subr.mxu0 0.0
        %418 = vmatpush1.msra.mxu0 0.0
        %419 = vmatprep.subr.mxu0 0.0
        %420 = vmatpush1.msra.mxu0 0.0
        %421 = vmatprep.subr.mxu0 0.0
        %422 = vmatpush1.msra.mxu0 0.0
        %423 = vmatprep.subr.mxu0 0.0
        %424 = vmatpush1.msra.mxu0 0.0
        %425 = vmatprep.subr.mxu0 0.0
        %426 = vmatpush1.msra.mxu0 0.0
        %427 = vmatprep.subr.mxu0 0.0
        %428 = vmatpush1.msra.mxu0 0.0
        %429 = vmatprep.subr.mxu0 0.0
        %430 = vmatpush1.msra.mxu0 0.0
        %431 = vmatprep.subr.mxu0 0.0
        %432 = vmatpush1.msra.mxu0 0.0
        %433 = vmatprep.subr.mxu0 0.0
        %434 = vmatpush1.msra.mxu0 0.0
        %435 = vmatprep.subr.mxu0 0.0
        %436 = vmatpush1.msra.mxu0 0.0
        %437 = vmatprep.subr.mxu0 0.0
        %438 = vmatpush1.msra.mxu0 0.0
        %439 = vmatprep.subr.mxu0 0.0
        %440 = vmatpush1.msra.mxu0 0.0
        %441 = vmatprep.subr.mxu0 0.0
        %442 = vmatpush1.msra.mxu0 0.0
        %443 = vmatprep.subr.mxu0 0.0
        %444 = vmatpush1.msra.mxu0 0.0
        %445 = vmatprep.subr.mxu0 0.0
        %446 = vmatpush1.msra.mxu0 0.0
        %447 = vmatprep.subr.mxu0 0.0
        %448 = vmatpush1.msra.mxu0 0.0
        %449 = vmatprep.subr.mxu0 0.0
        %450 = vmatpush1.msra.mxu0 0.0
        %451 = vmatprep.subr.mxu0 0.0
        %452 = vmatpush1.msra.mxu0 0.0
        %453 = vmatprep.subr.mxu0 0.0
        %454 = vmatpush1.msra.mxu0 0.0
        %455 = vmatprep.subr.mxu0 0.0
        %456 = vmatpush1.msra.mxu0 0.0
        %457 = vmatprep.subr.mxu0 0.0
        %458 = vmatpush1.msra.mxu0 0.0
        %459 = vmatprep.subr.mxu0 0.0
        %460 = vmatpush1.msra.mxu0 0.0
        %461 = vmatprep.subr.mxu0 0.0
        %462 = vmatpush1.msra.mxu0 0.0
        %463 = vmatprep.subr.mxu0 0.0
        %464 = vmatpush1.msra.mxu0 0.0
        %465 = vmatprep.subr.mxu0 0.0
        %466 = vmatpush1.msra.mxu0 0.0
        %467 = vmatprep.mubr.f32.mxu0 0.0
        %468 = vmatmul.mubr.f32.gmra.mrb[0].mxu0 %v394
        %v469 = vpop.f32.mrb[0].mxu0
        %v470 = vadd.f32 %v390, %v469
        %v471 = vpop.f32.mrb[0].mxu0
        %v472 = vadd.f32 %v390, %v471
        %473 = vdwg.mxu0
        %v474 = vmax.f32 %v470, 0.0
        %v475 = vmax.f32 %v472, 0.0
        %v476 = vld [vmem:[%s5] sm:$0x1]
        %v477 = vld [vmem:[#allocation2] sm:$0x1]
        %479 = vset.pattern.permute.xlu0 0
        %480 = vperm.xlu0 %479, %v477
        %v481 = vpop.permute.xlu0 %480
        %v483 = vlaneseq
        %v484 = vshrl.u32 %v483, 7
        %v485 = vsub.s32 0, %v484
        %v486 = vrot.slane %v481, %v485
        %vm487 = vcmask 31744
        %v489 = vsel %vm487, %v476, 0
        %vm491 = vcmask 1043456
        %v493 = vsel %vm491, %v474, 0
        %v496 = vsel %vm491, %v475, 0
        %498 = vmatprep.subr.mxu0 %v496
        %499 = vmatpush1.msra.mxu0 %v493
        %500 = vmatprep.subr.mxu0 0.0
        %501 = vmatpush1.msra.mxu0 0.0
        %502 = vmatprep.subr.mxu0 0.0
        %503 = vmatpush1.msra.mxu0 0.0
        %504 = vmatprep.subr.mxu0 0.0
        %505 = vmatpush1.msra.mxu0 0.0
        %506 = vmatprep.subr.mxu0 0.0
        %507 = vmatpush1.msra.mxu0 0.0
        %508 = vmatprep.subr.mxu0 0.0
        %509 = vmatpush1.msra.mxu0 0.0
        %510 = vmatprep.subr.mxu0 0.0
        %511 = vmatpush1.msra.mxu0 0.0
        %512 = vmatprep.subr.mxu0 0.0
        %513 = vmatpush1.msra.mxu0 0.0
        %514 = vmatprep.subr.mxu0 0.0
        %515 = vmatpush1.msra.mxu0 0.0
        %516 = vmatprep.subr.mxu0 0.0
        %517 = vmatpush1.msra.mxu0 0.0
        %518 = vmatprep.subr.mxu0 0.0
        %519 = vmatpush1.msra.mxu0 0.0
        %520 = vmatprep.subr.mxu0 0.0
        %521 = vmatpush1.msra.mxu0 0.0
        %522 = vmatprep.subr.mxu0 0.0
        %523 = vmatpush1.msra.mxu0 0.0
        %524 = vmatprep.subr.mxu0 0.0
        %525 = vmatpush1.msra.mxu0 0.0
        %526 = vmatprep.subr.mxu0 0.0
        %527 = vmatpush1.msra.mxu0 0.0
        %528 = vmatprep.subr.mxu0 0.0
        %529 = vmatpush1.msra.mxu0 0.0
        %530 = vmatprep.subr.mxu0 0.0
        %531 = vmatpush1.msra.mxu0 0.0
        %532 = vmatprep.subr.mxu0 0.0
        %533 = vmatpush1.msra.mxu0 0.0
        %534 = vmatprep.subr.mxu0 0.0
        %535 = vmatpush1.msra.mxu0 0.0
        %536 = vmatprep.subr.mxu0 0.0
        %537 = vmatpush1.msra.mxu0 0.0
        %538 = vmatprep.subr.mxu0 0.0
        %539 = vmatpush1.msra.mxu0 0.0
        %540 = vmatprep.subr.mxu0 0.0
        %541 = vmatpush1.msra.mxu0 0.0
        %542 = vmatprep.subr.mxu0 0.0
        %543 = vmatpush1.msra.mxu0 0.0
        %544 = vmatprep.subr.mxu0 0.0
        %545 = vmatpush1.msra.mxu0 0.0
        %546 = vmatprep.subr.mxu0 0.0
        %547 = vmatpush1.msra.mxu0 0.0
        %548 = vmatprep.subr.mxu0 0.0
        %549 = vmatpush1.msra.mxu0 0.0
        %550 = vmatprep.subr.mxu0 0.0
        %551 = vmatpush1.msra.mxu0 0.0
        %552 = vmatprep.subr.mxu0 0.0
        %553 = vmatpush1.msra.mxu0 0.0
        %554 = vmatprep.subr.mxu0 0.0
        %555 = vmatpush1.msra.mxu0 0.0
        %556 = vmatprep.subr.mxu0 0.0
        %557 = vmatpush1.msra.mxu0 0.0
        %558 = vmatprep.subr.mxu0 0.0
        %559 = vmatpush1.msra.mxu0 0.0
        %560 = vmatprep.subr.mxu0 0.0
        %561 = vmatpush1.msra.mxu0 0.0
        %562 = vmatprep.mubr.f32.mxu0 0.0
        %563 = vmatmul.mubr.f32.gmra.mrb[0].mxu0 %v489
        %v564 = vpop.f32.mrb[0].mxu0
        %v565 = vadd.f32 %v486, %v564
        %v566 = vpop.f32.mrb[0].mxu0
        %v567 = vadd.f32 %v486, %v566
        %568 = vdwg.mxu0
        %v569 = vmax.f32 %v565, 0.0
        %v570 = vmax.f32 %v567, 0.0
        %v573 = vcombine.low %v569, %v570
        %v575 = vunpack.c.l.s4 1966171168
        %v576 = vunpack.c.0.s8 %v575
        %v577 = vlaneseq
        %v578 = vshrl.u32 %v577, 7
        %v579 = vsub.s32 %v576, %v578
        %v580 = vrot.slane %v573, %v579
        %v582 = vunpack.c.l.s4 1966171168
        %v583 = vunpack.c.0.s8 %v582
        %v584 = vlaneseq
        %v585 = vshrl.u32 %v584, 7
        %v586 = vsub.s32 %v583, %v585
        %v587 = vrot.slane %v580, %v586
        %v589 = vlaneseq
        %vm590 = vcmp.ge.s32.totalorder %v589, 0
        %vm591 = vcmp.lt.s32.totalorder %v589, 256
        %vm592 = vmand %vm590, %vm591
        %593 = vst.msk [vmem:[%s296] sm:$0x3] %vm592, %v587
        %s594 = sand.u32 %s186, 1
        %s595 = scalar_lea.sflag [#allocation5], %s594
        %s596 = sand.u32 %s186, 1
        %s597 = smul.addr %s596, 2
        %s598 = scalar_lea.vmem [#allocation6], %s597
        // Predicated region
        $region53: #{tpu_custom_call.1} parent=47 // pred_check
          %p599 = pneg %p196
        $region54: #{tpu_custom_call.1} parent=47 // pred_check_branch
          %601 = sbr.rel (%p599) target = $region56
        $region55: #{tpu_custom_call.1} parent=47 // pred_region
          %s602 = smul.u32 2, %s26
          %s604 = ssub.s32 32, 32
          %605 = vsyncadd %s595, %s604
          %s606 = smul.addr %s602, 16
          %s607 = scalar_lea.hbm %s7, %s606
          %s609 = sshll.u32 %s598, 4
          %s610 = int_to_ptr.vmem [resolvable:$true] %s609
          %612 = dma.vmem_to_hbm [thread:$0]  %s610, 32, %s607, %s595
        $region56: #{tpu_custom_call.1} parent=47 // pred_fallthru
          _
      $region48: #{tpu_custom_call.1} parent=5 // pred_fallthru
        _
      %p613 = scmp.le.s32.totalorder 2, %s21
      // Predicated region
      $region57: #{tpu_custom_call.1} parent=5 // pred_check
        %p614 = pneg %p613
      $region58: #{tpu_custom_call.1} parent=5 // pred_check_branch
        %616 = sbr.rel (%p614) target = $region60
      $region59: #{tpu_custom_call.1} parent=5 // pred_region
        %s617 = ssub.s32 %s21, 2
        // Predicated region
        $region61: #{tpu_custom_call.1} parent=59 // pred_check
          %p618 = pneg %p202
        $region62: #{tpu_custom_call.1} parent=59 // pred_check_branch
          %620 = sbr.rel (%p618) target = $region64
        $region63: #{tpu_custom_call.1} parent=59 // pred_region
          %s621 = sand.u32 %s187, 1
          %s622 = scalar_lea.sflag [#allocation5], %s621
          %s623 = sand.u32 %s187, 1
          %s624 = smul.addr %s623, 2
          %s625 = scalar_lea.vmem [#allocation6], %s624
          %626 = dma.done %s622, 32
        $region64: #{tpu_custom_call.1} parent=59 // pred_fallthru
          _
      $region60: #{tpu_custom_call.1} parent=5 // pred_fallthru
        _
    $region6: #{tpu_custom_call.1} parent=1 // loop_footer
      %s25 = sadd.s32 1, %s21
    $region7: #{tpu_custom_call.1} parent=1 // loop_footer_branch
      %20 = sbr.rel target = $region3
    $region8: #{tpu_custom_call.1} parent=1 // loop_exit
      _
    %627 = vsyncpa [#allocation4], 1
    %s628 = scalar_lea.sflag [#allocation4], 1
    %629 = vsyncpa %s628, 1
    %630 = vsyncpa [#allocation5], 1
    %s631 = scalar_lea.sflag [#allocation5], 1
    %632 = vsyncpa %s631, 1

</llo_original>
